<compile_context>
chip_gen: v7x
topology: tpu7x:2x2x1
jax: 0.10.0
libtpu: 0.0.40
codegen_flags: <defaults>
</compile_context>

<pallas_src>
import jax
import jax.numpy as jnp
from jax.experimental import pallas as pl
from jax.experimental.pallas import tpu as pltpu

LANES = 128
# ~4 MiB per block: big enough to amortize the ~0.35 us per-grid-step overhead
# (>85% of HBM roofline), small enough that 2x double-buffered in+out (~16 MiB)
# fits comfortably in VMEM on v5e/v6e/v7x.
_DEFAULT_BLOCK_BYTES = 4 * 1024 * 1024


def _exp_kernel(x_ref, o_ref):
    # Elementwise exp on the current VMEM tile (lowers to the EUP, which has
    # huge headroom — the kernel is HBM-bound, not compute-bound).
    o_ref[...] = jnp.exp(x_ref[...])


def _sublane_multiple(dtype) -> int:
    # Sub-32-bit dtypes pack along sublanes: f32 -> 8, bf16 -> 16, int8/fp8 -> 32.
    itemsize = jnp.dtype(dtype).itemsize
    return {4: 8, 2: 16, 1: 32}.get(itemsize, 8)


def exp_activation(x, *, block_bytes=_DEFAULT_BLOCK_BYTES):
    """Elementwise exp via a Pallas TPU kernel. Accepts any shape/dtype."""
    orig_shape = x.shape
    orig_dtype = x.dtype
    n = x.size
    if n == 0:
        return x

    itemsize = jnp.dtype(orig_dtype).itemsize
    sublane = _sublane_multiple(orig_dtype)
    align = sublane * LANES  # minimal tile granule for this dtype

    # Flatten; pad only to the tiny (sublane*128) granule, and only if needed.
    # For typical NN tensor sizes this branch is skipped entirely, so there is
    # no extra HBM read/write pass in the wrapper.
    x_flat = jnp.ravel(x)
    rem = n % align
    padded = rem != 0
    if padded:
        x_flat = jnp.pad(x_flat, (0, align - rem))
    rows = x_flat.size // LANES
    x2d = x_flat.reshape(rows, LANES)  # free reshape of a contiguous array

    # Block rows: ~block_bytes per block, a multiple of the dtype's sublane
    # requirement, clamped to the (sublane-aligned) row count for small inputs.
    target_rows = max(sublane, block_bytes // (LANES * itemsize))
    target_rows = (target_rows // sublane) * sublane
    tile_rows = min(target_rows, rows)
    assert tile_rows % sublane == 0 and tile_rows >= sublane

    grid = (pl.cdiv(rows, tile_rows),)  # ragged last block handled by Pallas

    out2d = pl.pallas_call(
        _exp_kernel,
        out_shape=jax.ShapeDtypeStruct((rows, LANES), orig_dtype),
        grid_spec=pltpu.PrefetchScalarGridSpec(
            num_scalar_prefetch=0,
            grid=grid,
            in_specs=[pl.BlockSpec((tile_rows, LANES), lambda i: (i, 0))],
            out_specs=pl.BlockSpec((tile_rows, LANES), lambda i: (i, 0)),
        ),
        compiler_params=pltpu.CompilerParams(
            # "parallel" lets v7x shard the row-grid across its 2 TensorCores;
            # neutral on v5e/v6e.
            dimension_semantics=("parallel",),
            # Raise the scoped VMEM cap (v5e defaults to 16 MiB) so the
            # double-buffered ~16 MiB of blocks always fits; well under
            # physical VMEM on every generation.
            vmem_limit_bytes=32 * 1024 * 1024,
        ),
        cost_estimate=pl.CostEstimate(
            flops=0,
            transcendentals=n,
            bytes_accessed=2 * n * itemsize,
        ),
    )(x2d)

    if padded:
        return out2d.reshape(-1)[:n].reshape(orig_shape)
    return out2d.reshape(orig_shape)


if __name__ == "__main__":
    key = jax.random.PRNGKey(0)

    # 1) Small NCHW input consistent with the module's forward (aligned path:
    #    no padding, no slicing, single exact block).
    x = jax.random.normal(key, (2, 4, 16, 16), dtype=jnp.float32)
    y = exp_activation(x)
    jax.block_until_ready(y)
    y_ref = jnp.exp(x)
    assert y.shape == x.shape and y.dtype == x.dtype
    assert jnp.allclose(y, y_ref, rtol=1e-6, atol=1e-6)

    # 2) Odd-sized input: exercises the (tiny) pad + final-slice path.
    k1, k2 = jax.random.split(key)
    x_odd = jax.random.normal(k1, (3, 5, 7), dtype=jnp.float32)
    y_odd = exp_activation(x_odd)
    jax.block_until_ready(y_odd)
    assert y_odd.shape == x_odd.shape and y_odd.dtype == x_odd.dtype
    assert jnp.allclose(y_odd, jnp.exp(x_odd), rtol=1e-6, atol=1e-6)

    # 3) Multi-block grid with a ragged last block (small block_bytes so the
    #    test stays tiny while exercising the production tiling path).
    x_mb = jax.random.normal(k2, (2, 300, 128), dtype=jnp.float32)
    y_mb = exp_activation(x_mb, block_bytes=64 * 1024)
    jax.block_until_ready(y_mb)
    assert y_mb.shape == x_mb.shape and y_mb.dtype == x_mb.dtype
    assert jnp.allclose(y_mb, jnp.exp(x_mb), rtol=1e-6, atol=1e-6)

    print("KERNEL_OK")
</pallas_src>

<mosaic_0001>
module attributes {stable_mosaic.version = 11 : i64} {
  func.func @_exp_kernel(%arg0: i32, %arg1: memref<16x128xf32, #tpu.memory_space<vmem>>, %arg2: memref<16x128xf32, #tpu.memory_space<vmem>>) attributes {dimension_semantics = [#tpu.dimension_semantics<parallel>], iteration_bounds = array<i64: 1>, scalar_prefetch = 0 : i64, scratch_operands = 0 : i64, tpu.core_type = #tpu.core_type<tc>, window_params = [{transform_indices = @transform_0, window_bounds = array<i64: 16, 128>}, {transform_indices = @transform_1, window_bounds = array<i64: 16, 128>}]} {
    %c0 = arith.constant 0 : index
    %c0_0 = arith.constant 0 : index
    %0 = vector.load %arg1[%c0, %c0_0] : memref<16x128xf32, #tpu.memory_space<vmem>>, vector<16x128xf32>
    %1 = math.exp %0 : vector<16x128xf32>
    %c0_1 = arith.constant 0 : index
    %c0_2 = arith.constant 0 : index
    %2 = vector.load %arg2[%c0_1, %c0_2] : memref<16x128xf32, #tpu.memory_space<vmem>>, vector<16x128xf32>
    tpu.vector_store %arg2[%c0_1, %c0_2], %1 {strides = array<i32>} : memref<16x128xf32, #tpu.memory_space<vmem>>, vector<16x128xf32>,
    return
  }
  func.func @transform_0(%arg0: i32) -> (i32, i32) {
    %c0_i32 = arith.constant 0 : i32
    %c0_i32_0 = arith.constant 0 : i32
    return %arg0, %c0_i32 : i32, i32
  }
  func.func @transform_1(%arg0: i32) -> (i32, i32) {
    %c0_i32 = arith.constant 0 : i32
    %c0_i32_0 = arith.constant 0 : i32
    return %arg0, %c0_i32 : i32, i32
  }
}

</mosaic_0001>

<llo_original>
// kernel: tpu_custom_call.1
$region0: #{tpu_custom_call.1}
  #allocation0 [shape = 'u32[]', space=smem, size = 0x4, offset = 0x4, fixed_abs, tag = 'smem constant byte address 0x4 - core index']
  #allocation1 [shape = 'u32[144,128]{1,0:T(1,128)}', space=vmem, size = 0x12000, scoped, tag = 'internal scratch']
  %s0 = inlined_call_operand.hbm [shape: f32[16,128], index: 0, kind: input, shape index: {}]
  %s1 = inlined_call_operand.hbm [shape: f32[16,128], index: 1, kind: output, shape index: {}]
  %s2 = sld [smem:[#allocation0]]
  $region18: #{tpu_custom_call.1} parent=0
    _
  %s4 = ssub.s32 1, %s2
  %s5 = scalar_select 0, %s4, %s2
  $region1: #{tpu_custom_call.1} parent=0
    #allocation2 [shape = 'u8[8192]{0}', space=vmem, size = 0x2000, scoped, tag = 'input window, operand 0, single buffered']
    #allocation3 [shape = 's32[1]{0}', space=sflag, size = 0x4, scoped, tag = 'scoped memory for tpu_custom_call.1']
    #allocation4 [shape = 's32[1]{0}', space=sflag, size = 0x4, scoped, tag = 'scoped memory for tpu_custom_call.1']
    #allocation5 [shape = 'u8[8192]{0}', space=vmem, size = 0x2000, scoped, tag = 'output window, operand 0, single buffered']
    %6 = vsyncpa [#allocation3], 0
    %7 = vsyncpa [#allocation4], 0
    // Predicated region
    $region2: #{tpu_custom_call.1} parent=1 // pred_check
      _
    $region3: #{tpu_custom_call.1} parent=1 // pred_check_branch
      %9 = sbr.rel (0) target = $region5
    $region4: #{tpu_custom_call.1} parent=1 // pred_region
      %s11 = ssub.s32 256, 256
      %12 = vsyncadd [#allocation3], %s11
      %s13 = sshll.u32 [#allocation2], 4
      %s14 = int_to_ptr.vmem [resolvable:$true] %s13
      %19 = dma.hbm_to_vmem [thread:$0]  %s0, 256, %s14, [#allocation3], 128, 128, 8
    $region5: #{tpu_custom_call.1} parent=1 // pred_fallthru
      _
    // Predicated region
    $region6: #{tpu_custom_call.1} parent=1 // pred_check
      _
    $region7: #{tpu_custom_call.1} parent=1 // pred_check_branch
      %21 = sbr.rel (0) target = $region9
    $region8: #{tpu_custom_call.1} parent=1 // pred_region
      %22 = dma.done [#allocation3], 256
    $region9: #{tpu_custom_call.1} parent=1 // pred_fallthru
      _
    %v23 = vld [vmem:[#allocation2] sm:$0xff]
    %v24 = vld [vmem:[#allocation2 + $0x8] sm:$0xff]
    %v25 = vmul.f32 %v23, 1.442695
    %v26 = vpow.pop %v25
    %v27 = vmul.f32 %v24, 1.442695
    %v28 = vpow.pop %v27
    %29 = vst [vmem:[#allocation5] sm:$0xff] %v26
    %30 = vst [vmem:[#allocation5 + $0x8] sm:$0xff] %v28
    // Predicated region
    $region10: #{tpu_custom_call.1} parent=1 // pred_check
      _
    $region11: #{tpu_custom_call.1} parent=1 // pred_check_branch
      %32 = sbr.rel (0) target = $region13
    $region12: #{tpu_custom_call.1} parent=1 // pred_region
      %s34 = ssub.s32 256, 256
      %35 = vsyncadd [#allocation4], %s34
      %s36 = sshll.u32 [#allocation5], 4
      %s37 = int_to_ptr.vmem [resolvable:$true] %s36
      %42 = dma.vmem_to_hbm [thread:$0]  %s37, 256, %s1, [#allocation4], 128, 128, 8
    $region13: #{tpu_custom_call.1} parent=1 // pred_fallthru
      _
    // Predicated region
    $region14: #{tpu_custom_call.1} parent=1 // pred_check
      _
    $region15: #{tpu_custom_call.1} parent=1 // pred_check_branch
      %44 = sbr.rel (0) target = $region17
    $region16: #{tpu_custom_call.1} parent=1 // pred_region
      %45 = dma.done [#allocation4], 256
    $region17: #{tpu_custom_call.1} parent=1 // pred_fallthru
      _
    %46 = vsyncpa [#allocation3], 1
    %47 = vsyncpa [#allocation4], 1

</llo_original>
